<compile_context>
chip_gen: v7x
topology: tpu7x:2x2x1
jax: 0.10.0
libtpu: 0.0.40
codegen_flags: <defaults>
</compile_context>

<pallas_src>
import jax
import jax.numpy as jnp
from jax.experimental import pallas as pl
from jax.experimental.pallas import tpu as pltpu


# ----------------------------------------------------------------------------
# Preferred path: metadata-only fold (what the performance review recommends).
# ----------------------------------------------------------------------------
def height_compression(spatial_features_5d):
    """(N, C, D, H, W) -> (N, C*D, H, W). Free, zero-copy view/reshape."""
    N, C, D, H, W = spatial_features_5d.shape
    return jnp.reshape(spatial_features_5d, (N, C * D, H, W))


# ----------------------------------------------------------------------------
# Pallas fusion-point variant: lane-dense flat memcpy of the same buffer.
# ----------------------------------------------------------------------------
def _copy_kernel(x_ref, o_ref):
    # (rb, L) tile, contiguous & lane-dense.  Downstream BEV compute (scale/
    # bias, quantization, first-conv slab, ...) would be fused here instead of
    # a bare copy.
    o_ref[...] = x_ref[...]


def _flat_factorization(total):
    """Factor the flat element count as (rows, L), preferring a lane-dense L
    that is a large multiple of 128 (512-2048)."""
    for lane in (2048, 1024, 512, 384, 256, 128):
        if total % lane == 0:
            return total // lane, lane
    # Fallback (rarely hit): any divisor <= 2048; last dim is then full-extent
    # inside each block (still legal, stores may be masked).
    for lane in range(min(total, 2048), 0, -1):
        if total % lane == 0:
            return total // lane, lane
    return 1, total


def _row_block(rows, lane, itemsize, target_bytes):
    """Largest legal row-block (dtype-aware sublane multiple, or full extent)
    whose (rb, lane) tile stays within ~target_bytes per operand."""
    step = {1: 32, 2: 16}.get(itemsize, 8)  # i8/fp8 -> 32, bf16 -> 16, f32 -> 8
    max_rows = max(1, target_bytes // max(1, lane * itemsize))
    upper = min(rows, max_rows)

    best = None
    for d in range(step, upper + 1, step):
        if rows % d == 0:
            best = d
    if best is not None:
        return best
    if rows <= max_rows:
        return rows  # full extent: always layout-legal and within budget
    # Last resort: smallest sublane-multiple divisor (tiny tile, always fits).
    for d in range(step, rows + 1, step):
        if rows % d == 0:
            return d
    return rows  # pathological (e.g. prime rows): full extent is at least legal


def height_compression_pallas(spatial_features_5d, *, target_bytes=3 * 1024 * 1024):
    """(N, C, D, H, W) -> (N, C*D, H, W) via a lane-dense flat Pallas copy.

    `target_bytes` is the per-operand tile budget.  The conservative 3 MiB
    default keeps the double-buffered pipeline (2 operands x 2 buffers) within
    the default scoped VMEM on v5e (16 MiB) and well within v6e/v7x; raise it
    (e.g. 8-16 MiB on v6e) when fusing real compute and DMA is exposed.
    """
    N, C, D, H, W = spatial_features_5d.shape
    dtype = spatial_features_5d.dtype
    itemsize = jnp.dtype(dtype).itemsize
    total = N * C * D * H * W

    rows, lane = _flat_factorization(total)
    rb = _row_block(rows, lane, itemsize, target_bytes)
    grid = (rows // rb,)

    # Free, metadata-only views on both sides.
    x = jnp.reshape(spatial_features_5d, (rows, lane))

    tile_bytes = rb * lane * itemsize
    # 2 operands x 2 buffers x tile + headroom, clamped safe for v7x's 64 MiB
    # physical VMEM (and below v5e/v6e physical 128 MiB).
    vmem_limit = int(min(48 << 20, 4 * tile_bytes + (8 << 20)))

    out = pl.pallas_call(
        _copy_kernel,
        out_shape=jax.ShapeDtypeStruct((rows, lane), dtype),
        grid_spec=pltpu.PrefetchScalarGridSpec(
            num_scalar_prefetch=0,
            grid=grid,
            in_specs=[pl.BlockSpec((rb, lane), lambda i: (i, 0))],
            out_specs=pl.BlockSpec((rb, lane), lambda i: (i, 0)),
        ),
        compiler_params=pltpu.CompilerParams(
            dimension_semantics=("parallel",),  # shard copy across v7x's 2 TCs
            vmem_limit_bytes=vmem_limit,
        ),
    )(x)

    return jnp.reshape(out, (N, C * D, H, W))


# ----------------------------------------------------------------------------
# forward() analogue
# ----------------------------------------------------------------------------
def height_compression_forward(batch_dict, *, use_pallas_copy=False):
    """JAX analogue of HeightCompression.forward.

    batch_dict['encoded_spconv_tensor'] is expected to already be a dense
    (N, C, D, H, W) array.
    """
    # TODO(synk): spconv SparseConvTensor.dense() (sparse->dense scatter) has
    # no Pallas equivalent here; the kernel consumes the already-dense volume.
    dense = batch_dict["encoded_spconv_tensor"]
    if use_pallas_copy:
        batch_dict["spatial_features"] = height_compression_pallas(dense)
    else:
        # Dominant optimization per review: metadata-only reshape, no kernel.
        batch_dict["spatial_features"] = height_compression(dense)
    batch_dict["spatial_features_stride"] = batch_dict[
        "encoded_spconv_tensor_stride"
    ]
    return batch_dict


if __name__ == "__main__":
    # Small shapes consistent with the module: NUM_BEV_FEATURES = C * D = 32.
    N, C, D, H, W = 2, 8, 4, 32, 32
    key = jax.random.PRNGKey(0)
    dense_5d = jax.random.normal(key, (N, C, D, H, W), dtype=jnp.float32)

    batch_dict = {
        "encoded_spconv_tensor": dense_5d,
        "encoded_spconv_tensor_stride": 8,
    }

    # Default forward path: free reshape (the recommended production path).
    out_dict = height_compression_forward(batch_dict)
    spatial_features = jax.block_until_ready(out_dict["spatial_features"])

    # Run the Pallas fusion-point kernel once too (small target_bytes here so
    # the tiny test tensor still exercises a multi-step pipelined grid).
    out_pallas = jax.block_until_ready(
        height_compression_pallas(dense_5d, target_bytes=64 * 1024)
    )

    # Reference: exact PyTorch .view semantics via reshape.
    ref = jnp.reshape(dense_5d, (N, C * D, H, W))

    assert spatial_features.shape == (N, C * D, H, W), spatial_features.shape
    assert spatial_features.dtype == dense_5d.dtype
    assert jnp.array_equal(spatial_features, ref), "forward path mismatch"

    assert out_pallas.shape == (N, C * D, H, W), out_pallas.shape
    assert out_pallas.dtype == dense_5d.dtype
    assert jnp.array_equal(out_pallas, ref), "pallas kernel mismatch vs reshape"

    assert out_dict["spatial_features_stride"] == 8

    print("KERNEL_OK")
</pallas_src>

<mosaic_0001>
module attributes {stable_mosaic.version = 11 : i64} {
  func.func @_copy_kernel(%arg0: i32, %arg1: memref<8x2048xf32, #tpu.memory_space<vmem>>, %arg2: memref<8x2048xf32, #tpu.memory_space<vmem>>) attributes {dimension_semantics = [#tpu.dimension_semantics<parallel>], iteration_bounds = array<i64: 4>, scalar_prefetch = 0 : i64, scratch_operands = 0 : i64, tpu.core_type = #tpu.core_type<tc>, window_params = [{transform_indices = @transform_0, window_bounds = array<i64: 8, 2048>}, {transform_indices = @transform_1, window_bounds = array<i64: 8, 2048>}]} {
    %c0 = arith.constant 0 : index
    %c0_0 = arith.constant 0 : index
    %0 = vector.load %arg1[%c0, %c0_0] : memref<8x2048xf32, #tpu.memory_space<vmem>>, vector<8x2048xf32>
    %c0_1 = arith.constant 0 : index
    %c0_2 = arith.constant 0 : index
    %1 = vector.load %arg2[%c0_1, %c0_2] : memref<8x2048xf32, #tpu.memory_space<vmem>>, vector<8x2048xf32>
    tpu.vector_store %arg2[%c0_1, %c0_2], %0 {strides = array<i32>} : memref<8x2048xf32, #tpu.memory_space<vmem>>, vector<8x2048xf32>,
    return
  }
  func.func @transform_0(%arg0: i32) -> (i32, i32) {
    %c0_i32 = arith.constant 0 : i32
    %c0_i32_0 = arith.constant 0 : i32
    return %arg0, %c0_i32 : i32, i32
  }
  func.func @transform_1(%arg0: i32) -> (i32, i32) {
    %c0_i32 = arith.constant 0 : i32
    %c0_i32_0 = arith.constant 0 : i32
    return %arg0, %c0_i32 : i32, i32
  }
}

</mosaic_0001>

<llo_original>
// kernel: tpu_custom_call.1
$region0: #{tpu_custom_call.1}
  #allocation0 [shape = 'u32[]', space=smem, size = 0x4, offset = 0x4, fixed_abs, tag = 'smem constant byte address 0x4 - core index']
  #allocation1 [shape = 'u32[144,128]{1,0:T(1,128)}', space=vmem, size = 0x12000, scoped, tag = 'internal scratch']
  %s0 = inlined_call_operand.hbm [shape: f32[32,2048], index: 0, kind: input, shape index: {}]
  %s1 = inlined_call_operand.hbm [shape: f32[32,2048], index: 1, kind: output, shape index: {}]
  %s2 = sld [smem:[#allocation0]]
  $region41: #{tpu_custom_call.1} parent=0
    _
  %s4 = ssub.s32 1, %s2
  %s5 = scalar_select 0, %s4, %s2
  $region1: #{tpu_custom_call.1} parent=0
    #allocation2 [shape = 'u8[131072]{0}', space=vmem, size = 0x20000, scoped, tag = 'input window, operand 0']
    #allocation3 [shape = 's32[2]{0}', space=sflag, size = 0x8, scoped, tag = 'scoped memory for tpu_custom_call.1']
    #allocation4 [shape = 's32[2]{0}', space=sflag, size = 0x8, scoped, tag = 'scoped memory for tpu_custom_call.1']
    #allocation5 [shape = 'u8[131072]{0}', space=vmem, size = 0x20000, scoped, tag = 'output window, operand 0']
    %6 = vsyncpa [#allocation3], 0
    %s7 = scalar_lea.sflag [#allocation3], 1
    %8 = vsyncpa %s7, 0
    %9 = vsyncpa [#allocation4], 0
    %s10 = scalar_lea.sflag [#allocation4], 1
    %11 = vsyncpa %s10, 0
    loop: start=0, step=1, limit=6
    $region2: #{tpu_custom_call.1} parent=1 // loop_pre_header
      _
    $region3: #{tpu_custom_call.1} parent=1 // loop_header
      %s13 = sphi 0, %s17
      %p14 = scmp.ge.s32.totalorder %s13, 6
      %s23 = sphi 0, %s25
      %s26 = sphi 0, %s23
      %s27 = sphi 0, %s26
      %s43 = sphi 0, %s27
      %s49 = sphi 0, %s51
      %s52 = sphi 0, %s49
      %s53 = sphi 0, %s52
      %s69 = sphi 0, %s53
    $region4: #{tpu_custom_call.1} parent=1 // loop_header_branch
      %16 = sbr.rel (%p14) target = $region8
    $region5: #{tpu_custom_call.1} parent=1 // loop_body
      %s18 = ssub.s32 %s13, 1
      %s19 = ssub.s32 %s13, 2
      %s20 = sadd.s32 %s13, 1
      %s21 = ssub.s32 %s13, %s20
      %p22 = scmp.eq.s32.totalorder %s21, 0
      %s24 = sadd.s32 %s23, 1
      %s25 = scalar_select %p22, %s23, %s24
      %p28 = pneg %p22
      %p29 = scmp.eq.s32.totalorder %s13, 3
      %p30 = por %p28, %p29
      %p31 = scmp.ne.s32.totalorder %s23, %s26
      %p32 = scmp.eq.s32.totalorder %s13, 0
      %p33 = por %p31, %p32
      %p34 = scmp.ne.s32.totalorder %s23, %s26
      %p35 = scmp.eq.s32.totalorder %s18, 3
      %p36 = por %p34, %p35
      %p37 = scmp.ne.s32.totalorder %s26, %s27
      %p38 = scmp.eq.s32.totalorder %s18, 0
      %p39 = por %p37, %p38
      %p40 = scmp.ne.s32.totalorder %s26, %s27
      %p41 = scmp.eq.s32.totalorder %s19, 3
      %p42 = por %p40, %p41
      %p44 = scmp.ne.s32.totalorder %s27, %s43
      %p45 = scmp.eq.s32.totalorder %s19, 0
      %p46 = por %p44, %p45
      %s47 = ssub.s32 %s13, %s20
      %p48 = scmp.eq.s32.totalorder %s47, 0
      %s50 = sadd.s32 %s49, 1
      %s51 = scalar_select %p48, %s49, %s50
      %p54 = pneg %p48
      %p55 = scmp.eq.s32.totalorder %s13, 3
      %p56 = por %p54, %p55
      %p57 = scmp.ne.s32.totalorder %s49, %s52
      %p58 = scmp.eq.s32.totalorder %s13, 0
      %p59 = por %p57, %p58
      %p60 = scmp.ne.s32.totalorder %s49, %s52
      %p61 = scmp.eq.s32.totalorder %s18, 3
      %p62 = por %p60, %p61
      %p63 = scmp.ne.s32.totalorder %s52, %s53
      %p64 = scmp.eq.s32.totalorder %s18, 0
      %p65 = por %p63, %p64
      %p66 = scmp.ne.s32.totalorder %s52, %s53
      %p67 = scmp.eq.s32.totalorder %s19, 3
      %p68 = por %p66, %p67
      %p70 = scmp.ne.s32.totalorder %s53, %s69
      %p71 = scmp.eq.s32.totalorder %s19, 0
      %p72 = por %p70, %p71
      %p73 = scmp.le.s32.totalorder 1, %s13
      %p74 = scmp.lt.s32.totalorder %s13, 5
      %p75 = pnand %p73, %p74
      %p76 = pneg %p75
      // Predicated region
      $region9: #{tpu_custom_call.1} parent=5 // pred_check
        _
      $region10: #{tpu_custom_call.1} parent=5 // pred_check_branch
        %78 = sbr.rel (%p75) target = $region12
      $region11: #{tpu_custom_call.1} parent=5 // pred_region
        %s79 = ssub.s32 %s13, 1
      $region12: #{tpu_custom_call.1} parent=5 // pred_fallthru
        _
      %p80 = scmp.lt.s32.totalorder %s13, 4
      // Predicated region
      $region13: #{tpu_custom_call.1} parent=5 // pred_check
        %p81 = pneg %p80
      $region14: #{tpu_custom_call.1} parent=5 // pred_check_branch
        %83 = sbr.rel (%p81) target = $region16
      $region15: #{tpu_custom_call.1} parent=5 // pred_region
        // Predicated region
        $region17: #{tpu_custom_call.1} parent=15 // pred_check
          %p84 = pneg %p33
        $region18: #{tpu_custom_call.1} parent=15 // pred_check_branch
          %86 = sbr.rel (%p84) target = $region20
        $region19: #{tpu_custom_call.1} parent=15 // pred_region
          %s87 = sand.u32 %s23, 1
          %s88 = scalar_lea.sflag [#allocation3], %s87
          %s89 = sand.u32 %s23, 1
          %s90 = smul.addr %s89, 128
          %s91 = scalar_lea.vmem [#allocation2], %s90
          %s93 = ssub.s32 2048, 2048
          %94 = vsyncadd %s88, %s93
          %s95 = smul.addr %s13, 16
          %s96 = smul.addr %s95, 128
          %s97 = scalar_lea.hbm %s0, %s96
          %s99 = sshll.u32 %s91, 4
          %s100 = int_to_ptr.vmem [resolvable:$true] %s99
          %102 = dma.hbm_to_vmem [thread:$0]  %s97, 2048, %s100, %s88
        $region20: #{tpu_custom_call.1} parent=15 // pred_fallthru
          _
      $region16: #{tpu_custom_call.1} parent=5 // pred_fallthru
        _
      %p103 = scmp.le.s32.totalorder 1, %s13
      %p104 = scmp.lt.s32.totalorder %s13, 5
      %p105 = pnand %p103, %p104
      %p106 = pneg %p105
      // Predicated region
      $region21: #{tpu_custom_call.1} parent=5 // pred_check
        _
      $region22: #{tpu_custom_call.1} parent=5 // pred_check_branch
        %108 = sbr.rel (%p105) target = $region24
      $region23: #{tpu_custom_call.1} parent=5 // pred_region
        %s109 = ssub.s32 %s13, 1
        %s110 = sand.u32 %s26, 1
        %s111 = scalar_lea.sflag [#allocation3], %s110
        %s112 = sand.u32 %s26, 1
        %s113 = smul.addr %s112, 128
        %s114 = scalar_lea.vmem [#allocation2], %s113
        // Predicated region
        $region25: #{tpu_custom_call.1} parent=23 // pred_check
          %p115 = pneg %p39
        $region26: #{tpu_custom_call.1} parent=23 // pred_check_branch
          %117 = sbr.rel (%p115) target = $region28
        $region27: #{tpu_custom_call.1} parent=23 // pred_region
          %118 = dma.done %s111, 2048
        $region28: #{tpu_custom_call.1} parent=23 // pred_fallthru
          _
        %s119 = sand.u32 %s26, 1
        %s120 = scalar_lea.sflag [#allocation3], %s119
        %s121 = sand.u32 %s26, 1
        %s122 = smul.addr %s121, 128
        %s123 = scalar_lea.vmem [#allocation2], %s122
        %p124 = pneg %p39
        %p125 = pneg %p36
        %p126 = pneg %p65
        %p127 = pneg %p62
        %s128 = sand.u32 %s52, 1
        %s129 = scalar_lea.sflag [#allocation4], %s128
        %s130 = sand.u32 %s52, 1
        %s131 = smul.addr %s130, 128
        %s132 = scalar_lea.vmem [#allocation5], %s131
        %v133 = vld [vmem:[%s114] sm:$0xff]
        %v134 = vld [vmem:[%s114 + $0x8] sm:$0xff]
        %v135 = vld [vmem:[%s114 + $0x10] sm:$0xff]
        %v136 = vld [vmem:[%s114 + $0x18] sm:$0xff]
        %v137 = vld [vmem:[%s114 + $0x20] sm:$0xff]
        %v138 = vld [vmem:[%s114 + $0x28] sm:$0xff]
        %v139 = vld [vmem:[%s114 + $0x30] sm:$0xff]
        %v140 = vld [vmem:[%s114 + $0x38] sm:$0xff]
        %v141 = vld [vmem:[%s114 + $0x40] sm:$0xff]
        %v142 = vld [vmem:[%s114 + $0x48] sm:$0xff]
        %v143 = vld [vmem:[%s114 + $0x50] sm:$0xff]
        %v144 = vld [vmem:[%s114 + $0x58] sm:$0xff]
        %v145 = vld [vmem:[%s114 + $0x60] sm:$0xff]
        %v146 = vld [vmem:[%s114 + $0x68] sm:$0xff]
        %v147 = vld [vmem:[%s114 + $0x70] sm:$0xff]
        %v148 = vld [vmem:[%s114 + $0x78] sm:$0xff]
        %149 = vst [vmem:[%s132] sm:$0xff] %v133
        %150 = vst [vmem:[%s132 + $0x8] sm:$0xff] %v134
        %151 = vst [vmem:[%s132 + $0x10] sm:$0xff] %v135
        %152 = vst [vmem:[%s132 + $0x18] sm:$0xff] %v136
        %153 = vst [vmem:[%s132 + $0x20] sm:$0xff] %v137
        %154 = vst [vmem:[%s132 + $0x28] sm:$0xff] %v138
        %155 = vst [vmem:[%s132 + $0x30] sm:$0xff] %v139
        %156 = vst [vmem:[%s132 + $0x38] sm:$0xff] %v140
        %157 = vst [vmem:[%s132 + $0x40] sm:$0xff] %v141
        %158 = vst [vmem:[%s132 + $0x48] sm:$0xff] %v142
        %159 = vst [vmem:[%s132 + $0x50] sm:$0xff] %v143
        %160 = vst [vmem:[%s132 + $0x58] sm:$0xff] %v144
        %161 = vst [vmem:[%s132 + $0x60] sm:$0xff] %v145
        %162 = vst [vmem:[%s132 + $0x68] sm:$0xff] %v146
        %163 = vst [vmem:[%s132 + $0x70] sm:$0xff] %v147
        %164 = vst [vmem:[%s132 + $0x78] sm:$0xff] %v148
        %s165 = sand.u32 %s52, 1
        %s166 = scalar_lea.sflag [#allocation4], %s165
        %s167 = sand.u32 %s52, 1
        %s168 = smul.addr %s167, 128
        %s169 = scalar_lea.vmem [#allocation5], %s168
        // Predicated region
        $region29: #{tpu_custom_call.1} parent=23 // pred_check
          %p170 = pneg %p62
        $region30: #{tpu_custom_call.1} parent=23 // pred_check_branch
          %172 = sbr.rel (%p170) target = $region32
        $region31: #{tpu_custom_call.1} parent=23 // pred_region
          %s174 = ssub.s32 2048, 2048
          %175 = vsyncadd %s166, %s174
          %s176 = smul.addr %s18, 16
          %s177 = smul.addr %s176, 128
          %s178 = scalar_lea.hbm %s1, %s177
          %s180 = sshll.u32 %s169, 4
          %s181 = int_to_ptr.vmem [resolvable:$true] %s180
          %183 = dma.vmem_to_hbm [thread:$0]  %s181, 2048, %s178, %s166
        $region32: #{tpu_custom_call.1} parent=23 // pred_fallthru
          _
      $region24: #{tpu_custom_call.1} parent=5 // pred_fallthru
        _
      %p184 = scmp.le.s32.totalorder 2, %s13
      // Predicated region
      $region33: #{tpu_custom_call.1} parent=5 // pred_check
        %p185 = pneg %p184
      $region34: #{tpu_custom_call.1} parent=5 // pred_check_branch
        %187 = sbr.rel (%p185) target = $region36
      $region35: #{tpu_custom_call.1} parent=5 // pred_region
        %s188 = ssub.s32 %s13, 2
        // Predicated region
        $region37: #{tpu_custom_call.1} parent=35 // pred_check
          %p189 = pneg %p68
        $region38: #{tpu_custom_call.1} parent=35 // pred_check_branch
          %191 = sbr.rel (%p189) target = $region40
        $region39: #{tpu_custom_call.1} parent=35 // pred_region
          %s192 = sand.u32 %s53, 1
          %s193 = scalar_lea.sflag [#allocation4], %s192
          %s194 = sand.u32 %s53, 1
          %s195 = smul.addr %s194, 128
          %s196 = scalar_lea.vmem [#allocation5], %s195
          %197 = dma.done %s193, 2048
        $region40: #{tpu_custom_call.1} parent=35 // pred_fallthru
          _
      $region36: #{tpu_custom_call.1} parent=5 // pred_fallthru
        _
    $region6: #{tpu_custom_call.1} parent=1 // loop_footer
      %s17 = sadd.s32 1, %s13
    $region7: #{tpu_custom_call.1} parent=1 // loop_footer_branch
      %12 = sbr.rel target = $region3
    $region8: #{tpu_custom_call.1} parent=1 // loop_exit
      _
    %198 = vsyncpa [#allocation3], 1
    %s199 = scalar_lea.sflag [#allocation3], 1
    %200 = vsyncpa %s199, 1
    %201 = vsyncpa [#allocation4], 1
    %s202 = scalar_lea.sflag [#allocation4], 1
    %203 = vsyncpa %s202, 1

</llo_original>
